<compile_context>
chip_gen: v5e
topology: v5e:2x2
jax: 0.10.0
libtpu: 0.0.40
codegen_flags: <defaults>
</compile_context>

<pallas_src>
import jax
import jax.numpy as jnp
from jax.experimental import pallas as pl
from jax.experimental.pallas import tpu as pltpu

_LANE = 128


def _stereo_gain_kernel(gain_ref, x_ref, o_ref):
    # gain_ref: SMEM (2*B,) linear gains (exp already applied in wrapper)
    # x_ref:    VMEM block (C, TR, 128), C in {1, 2}
    # o_ref:    VMEM block (2, TR, 128)
    b = pl.program_id(0)
    g0 = gain_ref[2 * b]
    g1 = gain_ref[2 * b + 1]
    c = x_ref.shape[0]
    # Each store below is a fully dense, unmasked (TR, 128) slab (channel is a
    # leading, non-tiled dim). Mono inputs (c == 1) broadcast channel 0.
    o_ref[0] = (x_ref[0] * g0).astype(o_ref.dtype)
    o_ref[1] = (x_ref[c - 1] * g1).astype(o_ref.dtype)


def _cdiv(a, b):
    return -(-a // b)


def stereo_gain(input_signals, log_gain, *, vmem_block_budget_bytes=4 << 20):
    """Pallas implementation of StereoGain.forward.

    Args:
      input_signals: (B, C, L) float array, C in {1, 2}.
      log_gain:      (B, 2) float array (log-scale gains).
      vmem_block_budget_bytes: target bytes for one (input + output) block;
        double-buffering makes the resident footprint ~2x this, so the 4 MiB
        default stays well under the 16 MiB (v5e) / 32 MiB (v6e, v7x)
        scoped-VMEM defaults.

    Returns:
      (B, 2, L) array: input_signals * exp(log_gain)[..., None].
    """
    b, c, l = input_signals.shape
    assert c in (1, 2), "StereoGain expects mono or stereo input"

    in_dtype = input_signals.dtype
    out_dtype = jnp.result_type(in_dtype, log_gain.dtype)
    in_isz = jnp.dtype(in_dtype).itemsize
    out_isz = jnp.dtype(out_dtype).itemsize

    # Sublane granularity for the narrowest dtype involved: 8 (f32), 16 (bf16), 32 (i8/fp8).
    sub = max(8, 32 // min(in_isz, out_isz))

    # Bytes per dense 128-lane "row" of a block: C input rows + 2 output rows.
    row_bytes = c * _LANE * in_isz + 2 * _LANE * out_isz
    tr = max(sub, (vmem_block_budget_bytes // row_bytes) // sub * sub)

    # Rows needed to cover L, rounded to the sublane granularity; then round the
    # total up to a multiple of the tile so the grid divides exactly.
    rows_needed = _cdiv(_cdiv(l, _LANE), sub) * sub
    tr = min(tr, rows_needed)
    rows_total = _cdiv(rows_needed, tr) * tr
    l_pad = rows_total * _LANE

    x = input_signals
    if l_pad != l:
        x = jnp.pad(x, ((0, 0), (0, 0), (0, l_pad - l)))
    # Free reshape (contiguous last-dim split): (B, C, rows_total, 128).
    x = x.reshape(b, c, rows_total, _LANE)

    # exp hoisted out of the kernel; flat 1-D f32 table avoids 2-D SMEM padding.
    gains = jnp.exp(log_gain.astype(jnp.float32)).reshape(-1)  # (2B,)

    grid = (b, rows_total // tr)

    out = pl.pallas_call(
        _stereo_gain_kernel,
        out_shape=jax.ShapeDtypeStruct((b, 2, rows_total, _LANE), out_dtype),
        grid_spec=pl.GridSpec(
            grid=grid,
            in_specs=[
                # tiny (2B,) gain table lives whole in SMEM
                pl.BlockSpec(memory_space=pltpu.MemorySpace.SMEM),
                # one batch row (squeezed), all channels, a dense (TR, 128) time tile
                pl.BlockSpec((None, c, tr, _LANE), lambda bi, li: (bi, 0, li, 0)),
            ],
            out_specs=pl.BlockSpec((None, 2, tr, _LANE), lambda bi, li: (bi, 0, li, 0)),
        ),
        compiler_params=pltpu.CompilerParams(
            dimension_semantics=("parallel", "parallel")
        ),
    )(gains, x)

    out = out.reshape(b, 2, l_pad)
    if l_pad != l:
        out = out[:, :, :l]
    return out


def stereo_gain_ref(input_signals, log_gain):
    # Pure-JAX reference (mirrors the PyTorch forward exactly).
    return input_signals * jnp.exp(log_gain)[..., None]


if __name__ == "__main__":
    key = jax.random.PRNGKey(0)
    k1, k2, k3, k4, k5 = jax.random.split(key, 5)

    B = 2
    log_gain = 0.1 * jax.random.normal(k2, (B, 2), dtype=jnp.float32)

    # 1) Stereo, L a multiple of 128.
    x_stereo = jax.random.normal(k1, (B, 2, 1024), dtype=jnp.float32)
    y = jax.block_until_ready(stereo_gain(x_stereo, log_gain))
    assert y.shape == (B, 2, 1024)
    assert jnp.allclose(y, stereo_gain_ref(x_stereo, log_gain), rtol=1e-6, atol=1e-6)

    # 2) Mono input broadcast to stereo output.
    x_mono = jax.random.normal(k3, (B, 1, 1024), dtype=jnp.float32)
    y = jax.block_until_ready(stereo_gain(x_mono, log_gain))
    assert y.shape == (B, 2, 1024)
    assert jnp.allclose(y, stereo_gain_ref(x_mono, log_gain), rtol=1e-6, atol=1e-6)

    # 3) Ragged L (not a multiple of 128) -> pad/slice path.
    x_ragged = jax.random.normal(k4, (B, 2, 1000), dtype=jnp.float32)
    y = jax.block_until_ready(stereo_gain(x_ragged, log_gain))
    assert y.shape == (B, 2, 1000)
    assert jnp.allclose(y, stereo_gain_ref(x_ragged, log_gain), rtol=1e-6, atol=1e-6)

    # 4) Multi-tile time axis (tiny budget forces several row tiles per batch).
    x_multi = jax.random.normal(k5, (B, 2, 4096), dtype=jnp.float32)
    y = jax.block_until_ready(
        stereo_gain(x_multi, log_gain, vmem_block_budget_bytes=16 * 1024)
    )
    assert y.shape == (B, 2, 4096)
    assert jnp.allclose(y, stereo_gain_ref(x_multi, log_gain), rtol=1e-6, atol=1e-6)

    print("KERNEL_OK")
</pallas_src>

<mosaic_0001>
module attributes {stable_mosaic.version = 11 : i64} {
  func.func @_stereo_gain_kernel(%arg0: i32, %arg1: i32, %arg2: memref<4xf32, #tpu.memory_space<smem>>, %arg3: memref<1x2x8x128xf32, #tpu.memory_space<vmem>>, %arg4: memref<1x2x8x128xf32, #tpu.memory_space<vmem>>) attributes {dimension_semantics = [#tpu.dimension_semantics<parallel>, #tpu.dimension_semantics<parallel>], iteration_bounds = array<i64: 2, 1>, scalar_prefetch = 0 : i64, scratch_operands = 0 : i64, tpu.core_type = #tpu.core_type<tc>, window_params = [{transform_indices = @transform_0, window_bounds = array<i64: 4>}, {transform_indices = @transform_1, window_bounds = array<i64: 1, 2, 8, 128>}, {transform_indices = @transform_2, window_bounds = array<i64: 1, 2, 8, 128>}]} {
    %c2_i32 = arith.constant 2 : i32
    %0 = arith.muli %c2_i32, %arg0 : i32
    %1 = arith.index_cast %0 : i32 to index
    %2 = memref.load %arg2[%1] : memref<4xf32, #tpu.memory_space<smem>>
    %c2_i32_0 = arith.constant 2 : i32
    %3 = arith.muli %c2_i32_0, %arg0 : i32
    %c1_i32 = arith.constant 1 : i32
    %4 = arith.addi %3, %c1_i32 : i32
    %5 = arith.index_cast %4 : i32 to index
    %6 = memref.load %arg2[%5] : memref<4xf32, #tpu.memory_space<smem>>
    %c0 = arith.constant 0 : index
    %c0_1 = arith.constant 0 : index
    %c0_2 = arith.constant 0 : index
    %c0_3 = arith.constant 0 : index
    %7 = vector.load %arg3[%c0, %c0_1, %c0_2, %c0_3] : memref<1x2x8x128xf32, #tpu.memory_space<vmem>>, vector<1x1x8x128xf32>
    %8 = vector.shape_cast %7 : vector<1x1x8x128xf32> to vector<8x128xf32>
    %9 = vector.broadcast %2 : f32 to vector<8x128xf32>
    %10 = arith.mulf %8, %9 : vector<8x128xf32>
    %c0_4 = arith.constant 0 : index
    %c0_5 = arith.constant 0 : index
    %c0_6 = arith.constant 0 : index
    %c0_7 = arith.constant 0 : index
    %11 = vector.load %arg4[%c0_4, %c0_5, %c0_6, %c0_7] : memref<1x2x8x128xf32, #tpu.memory_space<vmem>>, vector<1x1x8x128xf32>
    %12 = vector.shape_cast %11 : vector<1x1x8x128xf32> to vector<8x128xf32>
    %13 = vector.shape_cast %10 : vector<8x128xf32> to vector<1x1x8x128xf32>
    tpu.vector_store %arg4[%c0_4, %c0_5, %c0_6, %c0_7], %13 {strides = array<i32>} : memref<1x2x8x128xf32, #tpu.memory_space<vmem>>, vector<1x1x8x128xf32>,
    %c0_8 = arith.constant 0 : index
    %c1 = arith.constant 1 : index
    %c0_9 = arith.constant 0 : index
    %c0_10 = arith.constant 0 : index
    %14 = vector.load %arg3[%c0_8, %c1, %c0_9, %c0_10] : memref<1x2x8x128xf32, #tpu.memory_space<vmem>>, vector<1x1x8x128xf32>
    %15 = vector.shape_cast %14 : vector<1x1x8x128xf32> to vector<8x128xf32>
    %16 = vector.broadcast %6 : f32 to vector<8x128xf32>
    %17 = arith.mulf %15, %16 : vector<8x128xf32>
    %c0_11 = arith.constant 0 : index
    %c1_12 = arith.constant 1 : index
    %c0_13 = arith.constant 0 : index
    %c0_14 = arith.constant 0 : index
    %18 = vector.load %arg4[%c0_11, %c1_12, %c0_13, %c0_14] : memref<1x2x8x128xf32, #tpu.memory_space<vmem>>, vector<1x1x8x128xf32>
    %19 = vector.shape_cast %18 : vector<1x1x8x128xf32> to vector<8x128xf32>
    %20 = vector.shape_cast %17 : vector<8x128xf32> to vector<1x1x8x128xf32>
    tpu.vector_store %arg4[%c0_11, %c1_12, %c0_13, %c0_14], %20 {strides = array<i32>} : memref<1x2x8x128xf32, #tpu.memory_space<vmem>>, vector<1x1x8x128xf32>,
    return
  }
  func.func @transform_0(%arg0: i32, %arg1: i32) -> i32 {
    %c0_i32 = arith.constant 0 : i32
    %c0_i32_0 = arith.constant 0 : i32
    return %c0_i32 : i32
  }
  func.func @transform_1(%arg0: i32, %arg1: i32) -> (i32, i32, i32, i32) {
    %c0_i32 = arith.constant 0 : i32
    %c0_i32_0 = arith.constant 0 : i32
    %c0_i32_1 = arith.constant 0 : i32
    return %arg0, %c0_i32, %arg1, %c0_i32_0 : i32, i32, i32, i32
  }
  func.func @transform_2(%arg0: i32, %arg1: i32) -> (i32, i32, i32, i32) {
    %c0_i32 = arith.constant 0 : i32
    %c0_i32_0 = arith.constant 0 : i32
    %c0_i32_1 = arith.constant 0 : i32
    return %arg0, %c0_i32, %arg1, %c0_i32_0 : i32, i32, i32, i32
  }
}

</mosaic_0001>

<llo_original>
// kernel: tpu_custom_call.1
$region0: #{tpu_custom_call.1}
  #allocation0 [shape = 'u32[]', space=smem, size = 0x4, offset = 0x4, fixed_abs, tag = 'smem constant byte address 0x4 - core index']
  #allocation1 [shape = 'u32[72,128]{1,0:T(1,128)}', space=vmem, size = 0x9000, scoped, tag = 'internal scratch']
  %s0 = inlined_call_operand.hbm [shape: f32[4], index: 0, kind: input, shape index: {}]
  %s1 = inlined_call_operand.hbm [shape: f32[2,2,8,128], index: 1, kind: input, shape index: {}]
  %s2 = inlined_call_operand.hbm [shape: f32[2,2,8,128], index: 2, kind: output, shape index: {}]
  %s3 = sld [smem:[#allocation0]]
  $region49: #{tpu_custom_call.1} parent=0
    _
  %s5 = ssub.s32 1, %s3
  %s6 = scalar_select 0, %s5, %s3
  $region1: #{tpu_custom_call.1} parent=0
    #allocation2 [shape = 'u8[512]{0}', space=smem, size = 0x200, scoped, tag = 'input window, operand 0, single buffered']
    #allocation3 [shape = 's32[2]{0}', space=sflag, size = 0x8, scoped, tag = 'scoped memory for tpu_custom_call.1']
    #allocation4 [shape = 's32[2]{0}', space=sflag, size = 0x8, scoped, tag = 'scoped memory for tpu_custom_call.1']
    #allocation5 [shape = 's32[2]{0}', space=sflag, size = 0x8, scoped, tag = 'scoped memory for tpu_custom_call.1']
    #allocation6 [shape = 'u8[16384]{0}', space=vmem, size = 0x4000, scoped, tag = 'input window, operand 1']
    #allocation7 [shape = 'u8[16384]{0}', space=vmem, size = 0x4000, scoped, tag = 'output window, operand 0']
    %7 = vsyncpa [#allocation5], 0
    %8 = vsyncpa [#allocation3], 0
    %s9 = scalar_lea.sflag [#allocation3], 1
    %10 = vsyncpa %s9, 0
    %11 = vsyncpa [#allocation4], 0
    %s12 = scalar_lea.sflag [#allocation4], 1
    %13 = vsyncpa %s12, 0
    loop: start=0, step=1, limit=4
    $region2: #{tpu_custom_call.1} parent=1 // loop_pre_header
      _
    $region3: #{tpu_custom_call.1} parent=1 // loop_header
      %s15 = sphi 0, %s19
      %p16 = scmp.ge.s32.totalorder %s15, 4
      %s22 = sphi 0, %s34
      %s23 = sphi 0, %s30
      %s24 = sphi 0, %s22
      %s25 = sphi 0, %s23
      %s26 = sphi 0, %s24
      %s27 = sphi 0, %s25
      %s35 = sphi 0, %s35
      %s37 = sphi 0, %s35
      %s38 = sphi 0, %s37
      %s52 = sphi 0, %s38
      %s60 = sphi 0, %s62
      %s63 = sphi 0, %s60
      %s64 = sphi 0, %s63
      %s80 = sphi 0, %s64
      %s88 = sphi 0, %s90
      %s91 = sphi 0, %s88
      %s92 = sphi 0, %s91
      %s108 = sphi 0, %s92
    $region4: #{tpu_custom_call.1} parent=1 // loop_header_branch
      %18 = sbr.rel (%p16) target = $region8
    $region5: #{tpu_custom_call.1} parent=1 // loop_body
      %s20 = ssub.s32 %s15, 1
      %s21 = ssub.s32 %s15, 2
      %s28 = sadd.s32 1, %s23
      %p29 = scmp.ge.s32.totalorder %s28, 1
      %s30 = scalar_select %p29, 0, %s28
      %s31 = sadd.s32 1, %s22
      %s32 = scalar_select %p29, %s31, %s22
      %p33 = scmp.ge.s32.totalorder %s32, 2
      %s34 = scalar_select %p33, 0, %s32
      %s36 = sadd.s32 %s35, 1
      %p39 = scmp.eq.s32.totalorder %s15, 1
      %p40 = scmp.ne.s32.totalorder %s35, %s37
      %p41 = scmp.eq.s32.totalorder %s15, 0
      %p42 = por %p40, %p41
      %p43 = scmp.ne.s32.totalorder %s35, %s37
      %p44 = scmp.eq.s32.totalorder %s20, 1
      %p45 = por %p43, %p44
      %p46 = scmp.ne.s32.totalorder %s37, %s38
      %p47 = scmp.eq.s32.totalorder %s20, 0
      %p48 = por %p46, %p47
      %p49 = scmp.ne.s32.totalorder %s37, %s38
      %p50 = scmp.eq.s32.totalorder %s21, 1
      %p51 = por %p49, %p50
      %p53 = scmp.ne.s32.totalorder %s38, %s52
      %p54 = scmp.eq.s32.totalorder %s21, 0
      %p55 = por %p53, %p54
      %s56 = ssub.s32 %s22, %s34
      %s57 = ssub.s32 %s23, %s30
      %s58 = sor.u32 %s56, %s57
      %p59 = scmp.eq.s32.totalorder %s58, 0
      %s61 = sadd.s32 %s60, 1
      %s62 = scalar_select %p59, %s60, %s61
      %p65 = pneg %p59
      %p66 = scmp.eq.s32.totalorder %s15, 1
      %p67 = por %p65, %p66
      %p68 = scmp.ne.s32.totalorder %s60, %s63
      %p69 = scmp.eq.s32.totalorder %s15, 0
      %p70 = por %p68, %p69
      %p71 = scmp.ne.s32.totalorder %s60, %s63
      %p72 = scmp.eq.s32.totalorder %s20, 1
      %p73 = por %p71, %p72
      %p74 = scmp.ne.s32.totalorder %s63, %s64
      %p75 = scmp.eq.s32.totalorder %s20, 0
      %p76 = por %p74, %p75
      %p77 = scmp.ne.s32.totalorder %s63, %s64
      %p78 = scmp.eq.s32.totalorder %s21, 1
      %p79 = por %p77, %p78
      %p81 = scmp.ne.s32.totalorder %s64, %s80
      %p82 = scmp.eq.s32.totalorder %s21, 0
      %p83 = por %p81, %p82
      %s84 = ssub.s32 %s22, %s34
      %s85 = ssub.s32 %s23, %s30
      %s86 = sor.u32 %s84, %s85
      %p87 = scmp.eq.s32.totalorder %s86, 0
      %s89 = sadd.s32 %s88, 1
      %s90 = scalar_select %p87, %s88, %s89
      %p93 = pneg %p87
      %p94 = scmp.eq.s32.totalorder %s15, 1
      %p95 = por %p93, %p94
      %p96 = scmp.ne.s32.totalorder %s88, %s91
      %p97 = scmp.eq.s32.totalorder %s15, 0
      %p98 = por %p96, %p97
      %p99 = scmp.ne.s32.totalorder %s88, %s91
      %p100 = scmp.eq.s32.totalorder %s20, 1
      %p101 = por %p99, %p100
      %p102 = scmp.ne.s32.totalorder %s91, %s92
      %p103 = scmp.eq.s32.totalorder %s20, 0
      %p104 = por %p102, %p103
      %p105 = scmp.ne.s32.totalorder %s91, %s92
      %p106 = scmp.eq.s32.totalorder %s21, 1
      %p107 = por %p105, %p106
      %p109 = scmp.ne.s32.totalorder %s92, %s108
      %p110 = scmp.eq.s32.totalorder %s21, 0
      %p111 = por %p109, %p110
      %p112 = scmp.le.s32.totalorder 1, %s15
      %p113 = scmp.lt.s32.totalorder %s15, 3
      %p114 = pnand %p112, %p113
      %p115 = pneg %p114
      // Predicated region
      $region9: #{tpu_custom_call.1} parent=5 // pred_check
        _
      $region10: #{tpu_custom_call.1} parent=5 // pred_check_branch
        %117 = sbr.rel (%p114) target = $region12
      $region11: #{tpu_custom_call.1} parent=5 // pred_region
        %s118 = ssub.s32 %s15, 1
        // Predicated region
        $region13: #{tpu_custom_call.1} parent=11 // pred_check
          %p119 = pneg %p48
        $region14: #{tpu_custom_call.1} parent=11 // pred_check_branch
          %121 = sbr.rel (%p119) target = $region16
        $region15: #{tpu_custom_call.1} parent=11 // pred_region
          %123 = vsyncadd [#allocation5], 0
          %s125 = sshll.u32 %s0, 4
          %s126 = int_to_ptr.hbm [resolvable:$true] %s125
          %128 = dma.hbm_to_smem %s126, 16, [#allocation2], [#allocation5]
        $region16: #{tpu_custom_call.1} parent=11 // pred_fallthru
          _
      $region12: #{tpu_custom_call.1} parent=5 // pred_fallthru
        _
      %p129 = scmp.lt.s32.totalorder %s15, 2
      // Predicated region
      $region17: #{tpu_custom_call.1} parent=5 // pred_check
        %p130 = pneg %p129
      $region18: #{tpu_custom_call.1} parent=5 // pred_check_branch
        %132 = sbr.rel (%p130) target = $region20
      $region19: #{tpu_custom_call.1} parent=5 // pred_region
        // Predicated region
        $region21: #{tpu_custom_call.1} parent=19 // pred_check
          %p133 = pneg %p70
        $region22: #{tpu_custom_call.1} parent=19 // pred_check_branch
          %135 = sbr.rel (%p133) target = $region24
        $region23: #{tpu_custom_call.1} parent=19 // pred_region
          %s136 = sand.u32 %s60, 1
          %s137 = scalar_lea.sflag [#allocation3], %s136
          %s138 = sand.u32 %s60, 1
          %s139 = smul.addr %s138, 16
          %s140 = scalar_lea.vmem [#allocation6], %s139
          %142 = vsyncadd %s137, 0
          %s143 = smul.addr %s22, 2
          %s144 = sadd.s32 %s23, %s143
          %s145 = smul.addr %s144, 8
          %s146 = scalar_lea.hbm %s1, %s145
          %s147 = sshll.u32 %s146, 4
          %s148 = int_to_ptr.hbm [resolvable:$true] %s147
          %s149 = sshll.u32 %s140, 4
          %s150 = int_to_ptr.vmem [resolvable:$true] %s149
          %155 = dma.hbm_to_vmem [thread:$0]  %s148, 256, %s150, %s137, 128, 128, 8
        $region24: #{tpu_custom_call.1} parent=19 // pred_fallthru
          _
      $region20: #{tpu_custom_call.1} parent=5 // pred_fallthru
        _
      %p156 = scmp.le.s32.totalorder 1, %s15
      %p157 = scmp.lt.s32.totalorder %s15, 3
      %p158 = pnand %p156, %p157
      %p159 = pneg %p158
      // Predicated region
      $region25: #{tpu_custom_call.1} parent=5 // pred_check
        _
      $region26: #{tpu_custom_call.1} parent=5 // pred_check_branch
        %161 = sbr.rel (%p158) target = $region28
      $region27: #{tpu_custom_call.1} parent=5 // pred_region
        %s162 = ssub.s32 %s15, 1
        // Predicated region
        $region29: #{tpu_custom_call.1} parent=27 // pred_check
          %p163 = pneg %p48
        $region30: #{tpu_custom_call.1} parent=27 // pred_check_branch
          %165 = sbr.rel (%p163) target = $region32
        $region31: #{tpu_custom_call.1} parent=27 // pred_region
          %167 = dma.done [#allocation5], 16
        $region32: #{tpu_custom_call.1} parent=27 // pred_fallthru
          _
        %s168 = sand.u32 %s63, 1
        %s169 = scalar_lea.sflag [#allocation3], %s168
        %s170 = sand.u32 %s63, 1
        %s171 = smul.addr %s170, 16
        %s172 = scalar_lea.vmem [#allocation6], %s171
        // Predicated region
        $region33: #{tpu_custom_call.1} parent=27 // pred_check
          %p173 = pneg %p76
        $region34: #{tpu_custom_call.1} parent=27 // pred_check_branch
          %175 = sbr.rel (%p173) target = $region36
        $region35: #{tpu_custom_call.1} parent=27 // pred_region
          %177 = dma.done %s169, 256
        $region36: #{tpu_custom_call.1} parent=27 // pred_fallthru
          _
        %178 = sfence
        %p179 = pneg %p48
        %p180 = pneg %p45
        %s181 = sand.u32 %s63, 1
        %s182 = scalar_lea.sflag [#allocation3], %s181
        %s183 = sand.u32 %s63, 1
        %s184 = smul.addr %s183, 16
        %s185 = scalar_lea.vmem [#allocation6], %s184
        %p186 = pneg %p76
        %p187 = pneg %p73
        %p188 = pneg %p104
        %p189 = pneg %p101
        %s190 = sand.u32 %s91, 1
        %s191 = scalar_lea.sflag [#allocation4], %s190
        %s192 = sand.u32 %s91, 1
        %s193 = smul.addr %s192, 16
        %s194 = scalar_lea.vmem [#allocation7], %s193
        %s195 = smul.u32 %s24, 2
        %s196 = sld [smem:[#allocation2 + %s195]]
        %s197 = sadd.s32 %s195, 1
        %s198 = sld [smem:[#allocation2 + %s197]]
        %v199 = vld [vmem:[%s172] sm:$0xff]
        %v200 = vstv %s196
        %v201 = vmul.f32 %v199, %v200
        %202 = vst [vmem:[%s194] sm:$0xff] %v201
        %s203 = scalar_lea.vmem %s172, 8 [#allocation6]
        %v204 = vld [vmem:[%s203] sm:$0xff]
        %v205 = vstv %s198
        %v206 = vmul.f32 %v204, %v205
        %s207 = scalar_lea.vmem %s194, 8 [#allocation7]
        %208 = vst [vmem:[%s207] sm:$0xff] %v206
        %s209 = sand.u32 %s91, 1
        %s210 = scalar_lea.sflag [#allocation4], %s209
        %s211 = sand.u32 %s91, 1
        %s212 = smul.addr %s211, 16
        %s213 = scalar_lea.vmem [#allocation7], %s212
        // Predicated region
        $region37: #{tpu_custom_call.1} parent=27 // pred_check
          %p214 = pneg %p101
        $region38: #{tpu_custom_call.1} parent=27 // pred_check_branch
          %216 = sbr.rel (%p214) target = $region40
        $region39: #{tpu_custom_call.1} parent=27 // pred_region
          %218 = vsyncadd %s210, 0
          %s219 = smul.addr %s24, 2
          %s220 = sadd.s32 %s25, %s219
          %s221 = smul.addr %s220, 8
          %s222 = scalar_lea.hbm %s2, %s221
          %s223 = sshll.u32 %s213, 4
          %s224 = int_to_ptr.vmem [resolvable:$true] %s223
          %s225 = sshll.u32 %s222, 4
          %s226 = int_to_ptr.hbm [resolvable:$true] %s225
          %231 = dma.vmem_to_hbm [thread:$0]  %s224, 256, %s226, %s210, 128, 128, 8
        $region40: #{tpu_custom_call.1} parent=27 // pred_fallthru
          _
      $region28: #{tpu_custom_call.1} parent=5 // pred_fallthru
        _
      %p232 = scmp.le.s32.totalorder 2, %s15
      // Predicated region
      $region41: #{tpu_custom_call.1} parent=5 // pred_check
        %p233 = pneg %p232
      $region42: #{tpu_custom_call.1} parent=5 // pred_check_branch
        %235 = sbr.rel (%p233) target = $region44
      $region43: #{tpu_custom_call.1} parent=5 // pred_region
        %s236 = ssub.s32 %s15, 2
        // Predicated region
        $region45: #{tpu_custom_call.1} parent=43 // pred_check
          %p237 = pneg %p107
        $region46: #{tpu_custom_call.1} parent=43 // pred_check_branch
          %239 = sbr.rel (%p237) target = $region48
        $region47: #{tpu_custom_call.1} parent=43 // pred_region
          %s240 = sand.u32 %s92, 1
          %s241 = scalar_lea.sflag [#allocation4], %s240
          %s242 = sand.u32 %s92, 1
          %s243 = smul.addr %s242, 16
          %s244 = scalar_lea.vmem [#allocation7], %s243
          %246 = dma.done %s241, 256
        $region48: #{tpu_custom_call.1} parent=43 // pred_fallthru
          _
      $region44: #{tpu_custom_call.1} parent=5 // pred_fallthru
        _
    $region6: #{tpu_custom_call.1} parent=1 // loop_footer
      %s19 = sadd.s32 1, %s15
    $region7: #{tpu_custom_call.1} parent=1 // loop_footer_branch
      %14 = sbr.rel target = $region3
    $region8: #{tpu_custom_call.1} parent=1 // loop_exit
      _
    %247 = vsyncpa [#allocation3], 1
    %s248 = scalar_lea.sflag [#allocation3], 1
    %249 = vsyncpa %s248, 1
    %250 = vsyncpa [#allocation4], 1
    %s251 = scalar_lea.sflag [#allocation4], 1
    %252 = vsyncpa %s251, 1
    %253 = vsyncpa [#allocation5], 1
    %s254 = scalar_lea.sflag [#allocation5], 1
    %255 = vsyncpa %s254, 1

</llo_original>
